<compile_context>
chip_gen: v7x
topology: tpu7x:2x2x1
jax: 0.10.0
libtpu: 0.0.40
codegen_flags: <defaults>
</compile_context>

<pallas_src>
import math

import jax
import jax.numpy as jnp
from jax.experimental import pallas as pl
from jax.experimental.pallas import tpu as pltpu

LOG_2PI = math.log(2.0 * math.pi)
BN_EPS = 1e-5


# ---------------------------------------------------------------------------
# Shared in-kernel math.
# ---------------------------------------------------------------------------
def _route(x, w_kv, b_kv, mu, g_coef, bias_ch, gt):
    """PMA routing for one batch tile: x (tb, N, F) -> O (tb, F)."""
    tb, n_items, F = x.shape
    rows = tb * n_items
    ch = gt.shape[0]

    # Fused fc_k | fc_v: one (rows, F) @ (F, 2F) MXU matmul (block-diagonal
    # weights, bf16 operands by default, f32 accumulation).
    xf = x.reshape(rows, F)
    kv = jnp.dot(xf.astype(w_kv.dtype), w_kv,
                 preferred_element_type=jnp.float32) + b_kv
    k = kv[:, :F]                                   # 128-lane aligned split
    v = kv[:, F:].reshape(tb, n_items, F)

    # Hot elementwise pass over (rows, F): just sub + square.  All per-feature
    # Gaussian constants were folded into g_coef / bias_ch by the wrapper.
    diff = k - mu
    sq = diff * diff

    # Per-(cap, head) score via one MXU matmul against the coef-folded
    # grouping matrix, plus the precomputed (1, C*H) bias.
    score = jnp.dot(sq, g_coef, preferred_element_type=jnp.float32) + bias_ch
    score = score.reshape(tb, n_items, ch)

    # Softmax over the item axis (N) with deferred normalization: the
    # reciprocal is taken on the small (tb, C*H) tensor before expansion.
    score = score - jnp.max(score, axis=1, keepdims=True)
    ea = jnp.exp(score)                             # (tb, N, C*H) unnormalized
    inv_denom = pl.reciprocal(jnp.sum(ea, axis=1))  # (tb, C*H)

    # Expand per-head weights back to the F-lane layout (0/1 matmul, exact)
    # and aggregate the values.
    ea_full = jnp.dot(ea.reshape(rows, ch), gt,
                      preferred_element_type=jnp.float32).reshape(tb, n_items, F)
    numer = jnp.sum(ea_full * v, axis=1)            # (tb, F)
    inv_full = jnp.dot(inv_denom, gt, preferred_element_type=jnp.float32)
    return mu + numer * inv_full


def _bn(o, g, b):
    # TODO(synk): BatchNorm running_mean/running_var (momentum) buffers are not
    # updated; training-mode batch statistics are applied, as in the PyTorch
    # module's training forward.
    mean = jnp.mean(o, axis=0, keepdims=True)
    var = jnp.mean((o - mean) * (o - mean), axis=0, keepdims=True)
    return (o - mean) * jax.lax.rsqrt(var + BN_EPS) * g + b


def _bn_fc_tail(o, g0, b0, w_o, b_o, g1, b1):
    o = _bn(o, g0, b0)
    fo = jnp.dot(o, w_o, preferred_element_type=jnp.float32) + b_o
    o = o + jnp.maximum(fo, 0.0)
    return _bn(o, g1, b1)


# ---------------------------------------------------------------------------
# Kernels.
# ---------------------------------------------------------------------------
def _routing_kernel(x_ref, wkv_ref, bkv_ref, mu_ref, gcoef_ref, bias_ref,
                    gt_ref, o_ref):
    o_ref[...] = _route(x_ref[...], wkv_ref[...], bkv_ref[...], mu_ref[...],
                        gcoef_ref[...], bias_ref[...], gt_ref[...])


def _bn_fc_kernel(o_ref, g0_ref, b0_ref, wo_ref, bo_ref, g1_ref, b1_ref, out_ref):
    out_ref[...] = _bn_fc_tail(o_ref[...], g0_ref[...], b0_ref[...], wo_ref[...],
                               bo_ref[...], g1_ref[...], b1_ref[...])


def _fused_kernel(x_ref, wkv_ref, bkv_ref, mu_ref, gcoef_ref, bias_ref, gt_ref,
                  g0_ref, b0_ref, wo_ref, bo_ref, g1_ref, b1_ref, out_ref):
    o = _route(x_ref[...], wkv_ref[...], bkv_ref[...], mu_ref[...],
               gcoef_ref[...], bias_ref[...], gt_ref[...])
    out_ref[...] = _bn_fc_tail(o, g0_ref[...], b0_ref[...], wo_ref[...],
                               bo_ref[...], g1_ref[...], b1_ref[...])


# ---------------------------------------------------------------------------
# Wrapper.
# ---------------------------------------------------------------------------
def _vmem_limit_bytes():
    # Generation-aware budget: half of physical VMEM (-> 64 MiB on v5e/v6e,
    # 32 MiB on v7x).  Conservative fallback if the query is unavailable.
    try:
        cap = int(pltpu.get_tpu_info().vmem_capacity_bytes)
    except Exception:
        cap = 64 * 1024 * 1024
    return max(cap // 2, 32 * 1024 * 1024)


def _select_batch_tile(B, N, F, vmem_limit, max_batch_tile=None):
    # Conservative per-batch-row live-VMEM estimate for the routing kernel:
    # double-buffered x tile, kv (K|V), squared-diff and expanded-attention
    # slabs (all f32) plus bf16 staging ~= 8 F-wide f32 rows per item.
    bytes_per_batch_row = 8 * N * F * 4
    tb_cap = (int(vmem_limit * 0.6) // bytes_per_batch_row) // 8 * 8
    tb_cap = max(8, min(tb_cap, 512))     # rows = tb*N fills the MXU well before 512
    if max_batch_tile is not None:
        tb_cap = max(8, min(tb_cap, max_batch_tile))
    if B <= tb_cap:
        return B, True                    # whole batch in one tile -> fused kernel
    n_tiles = pl.cdiv(B, tb_cap)          # >= 2 here, so megacore gets >= 2 steps
    tb = -(-B // n_tiles)                 # ceil(B / n_tiles)
    tb = ((tb + 7) // 8) * 8              # 8-sublane aligned
    return min(tb, tb_cap), False


def transformer_router_forward(pose, params, *, num_heads,
                               mxu_dtype=jnp.bfloat16, max_batch_tile=None):
    B, N, C, D = pose.shape
    H = num_heads
    assert D % H == 0
    dh = D // H
    F = C * D
    CH = C * H
    f32 = jnp.float32

    # ---- one-time parameter preprocessing (tiny, plain JAX glue) ----
    eye_c = jnp.eye(C, dtype=f32)
    w_kv = jnp.concatenate([jnp.kron(eye_c, params["WkT"]),
                            jnp.kron(eye_c, params["WvT"])],
                           axis=1).astype(mxu_dtype)                      # (F, 2F)
    b_kv = jnp.concatenate([jnp.tile(params["bk"], (1, C)),
                            jnp.tile(params["bv"], (1, C))], axis=1)      # (1, 2F)
    head_mask = (jnp.arange(D)[:, None] // dh
                 == jnp.arange(H)[None, :]).astype(f32)                   # (D, H)
    g_mat = jnp.kron(eye_c, head_mask)                                    # (F, CH)
    gt_mat = g_mat.T                                                      # (CH, F)

    inv_sqrt_d = 1.0 / math.sqrt(D)
    mu_flat = params["M"].reshape(1, F)
    sigma = jax.nn.softplus(params["S"]).reshape(1, F)
    # Fold -0.5/sigma^2/sqrt(D) into the grouping matrix, and all remaining
    # per-head constants (sum over the group of -0.5*log2pi - log sigma, plus
    # log p, all /sqrt(D)) into a single (1, CH) bias.
    g_coef = g_mat * ((-0.5 / (sigma * sigma)) * inv_sqrt_d).reshape(F, 1)  # (F, CH)
    bias_ch = (jnp.dot(-0.5 * LOG_2PI - jnp.log(sigma), g_mat)
               + jnp.repeat(jax.nn.log_softmax(params["p"], axis=-1), H, axis=1)
               ) * inv_sqrt_d                                             # (1, CH)

    w_o = jnp.kron(eye_c, params["WoT"])                                  # (F, F)
    b_o = jnp.tile(params["bo"], (1, C))                                  # (1, F)
    g0 = params["g0"].reshape(1, F)
    b0 = params["b0"].reshape(1, F)
    g1 = params["g1"].reshape(1, F)
    b1 = params["b1"].reshape(1, F)

    x = pose.reshape(B, N, F)          # lane-dense input view (F = C*D lanes)

    vmem_limit = _vmem_limit_bytes()
    tb, fused = _select_batch_tile(B, N, F, vmem_limit, max_batch_tile)
    vmem_spec = lambda: pl.BlockSpec(memory_space=pltpu.MemorySpace.VMEM)

    if fused:
        # Whole batch fits one tile: one launch, no HBM round trip of the
        # routed tensor (dominant cost at small B).
        out_flat = pl.pallas_call(
            _fused_kernel,
            out_shape=jax.ShapeDtypeStruct((B, F), f32),
            in_specs=[vmem_spec() for _ in range(13)],
            out_specs=vmem_spec(),
            compiler_params=pltpu.CompilerParams(vmem_limit_bytes=vmem_limit),
        )(x, w_kv, b_kv, mu_flat, g_coef, bias_ch, gt_mat,
          g0, b0, w_o, b_o, g1, b1)
        return out_flat.reshape(B, C, D)

    # ---- gridded routing over the (zero-padded) batch axis ----
    n_tiles = pl.cdiv(B, tb)
    b_pad = n_tiles * tb
    if b_pad != B:
        x = jnp.pad(x, ((0, b_pad - B), (0, 0), (0, 0)))

    full = lambda i: (0, 0)
    # TODO(synk): on bandwidth-poor v5e, pipeline_mode=pl.Buffered(3) on the x
    # input may hide residual DMA once tiles are streaming (measure first).
    routed = pl.pallas_call(
        _routing_kernel,
        out_shape=jax.ShapeDtypeStruct((b_pad, F), f32),
        grid=(n_tiles,),
        in_specs=[
            pl.BlockSpec((tb, N, F), lambda i: (i, 0, 0)),
            pl.BlockSpec((F, 2 * F), full),
            pl.BlockSpec((1, 2 * F), full),
            pl.BlockSpec((1, F), full),
            pl.BlockSpec((F, CH), full),
            pl.BlockSpec((1, CH), full),
            pl.BlockSpec((CH, F), full),
        ],
        out_specs=pl.BlockSpec((tb, F), lambda i: (i, 0)),
        compiler_params=pltpu.CompilerParams(
            dimension_semantics=("parallel",),
            vmem_limit_bytes=vmem_limit,
        ),
    )(x, w_kv, b_kv, mu_flat, g_coef, bias_ch, gt_mat)

    # Drop padded rows before the batch-coupled BatchNorm tail so they do not
    # bias the batch statistics.
    routed = routed[:B]

    # TODO(synk): for very large B (B*F f32 approaching the VMEM budget) this
    # grid-less tail should become a batch-tiled two-pass BN (partial stats,
    # then normalize + fc_o + BN); fine for typical batch sizes.
    out_flat = pl.pallas_call(
        _bn_fc_kernel,
        out_shape=jax.ShapeDtypeStruct((B, F), f32),
        in_specs=[vmem_spec() for _ in range(7)],
        out_specs=vmem_spec(),
        compiler_params=pltpu.CompilerParams(vmem_limit_bytes=vmem_limit),
    )(routed, g0, b0, w_o, b_o, g1, b1)
    return out_flat.reshape(B, C, D)


# ---------------------------------------------------------------------------
# Parameters and pure-JAX reference (mirrors the PyTorch PMA training forward).
# ---------------------------------------------------------------------------
def init_params(key, dim, num_seeds):
    ks = jax.random.split(key, 9)

    def uni(k, shape, bound):
        return jax.random.uniform(k, shape, jnp.float32, -bound, bound)

    kb = math.sqrt(6.0 / dim)                # ~ kaiming_uniform (fan_in = dim)
    xb = math.sqrt(6.0 / (1 + num_seeds))    # ~ xavier_uniform on (1, num_seeds)
    lb = math.sqrt(1.0 / dim)                # nn.Linear default bound
    return dict(
        M=uni(ks[0], (num_seeds, dim), kb),
        S=uni(ks[1], (num_seeds, dim), kb),
        p=uni(ks[2], (1, num_seeds), xb),
        WkT=uni(ks[3], (dim, dim), lb), bk=uni(ks[4], (1, dim), lb),
        WvT=uni(ks[5], (dim, dim), lb), bv=uni(ks[6], (1, dim), lb),
        WoT=uni(ks[7], (dim, dim), lb), bo=uni(ks[8], (1, dim), lb),
        g0=jnp.ones((num_seeds, dim), jnp.float32),
        b0=jnp.zeros((num_seeds, dim), jnp.float32),
        g1=jnp.ones((num_seeds, dim), jnp.float32),
        b1=jnp.zeros((num_seeds, dim), jnp.float32),
    )


def reference_forward(pose, params, num_heads, mxu_dtype=None):
    b, N, C, D = pose.shape
    f32 = jnp.float32
    prec = jax.lax.Precision.HIGHEST

    def lin(x, w, bias):
        if mxu_dtype is None or mxu_dtype == jnp.float32:
            y = jnp.einsum("bncd,de->bnce", x, w, precision=prec)
        else:  # match the kernel's mixed-precision matmul (bf16 in, f32 acc)
            y = jnp.einsum("bncd,de->bnce", x.astype(mxu_dtype),
                           w.astype(mxu_dtype), preferred_element_type=f32)
        return y + bias[0]

    K = lin(pose, params["WkT"], params["bk"])
    V = lin(pose, params["WvT"], params["bv"])
    M = jnp.broadcast_to(params["M"][None], (b, C, D))
    sigma = jax.nn.softplus(jnp.broadcast_to(params["S"][None], (b, C, D)))
    p = jax.nn.softmax(jnp.broadcast_to(params["p"], (b, C)), axis=-1)
    mu_ = jnp.concatenate(jnp.split(M, num_heads, axis=2), axis=0)
    sigma_ = jnp.concatenate(jnp.split(sigma, num_heads, axis=2), axis=0)
    p_ = jnp.tile(p, (num_heads, 1))
    K_ = jnp.concatenate(jnp.split(K, num_heads, axis=3), axis=0)
    V_ = jnp.concatenate(jnp.split(V, num_heads, axis=3), axis=0)
    diff = K_ - mu_[:, None]
    sig = sigma_[:, None]
    ll = (-0.5 * LOG_2PI - jnp.log(sig) - 0.5 * (diff ** 2 / sig ** 2)).sum(-1)
    ll = ll + jnp.log(p_)[:, None, :]
    A = jax.nn.softmax(ll / math.sqrt(D), axis=1)[..., None]
    O = mu_ + jnp.sum(A * V_, axis=1)
    O = jnp.concatenate(jnp.split(O, num_heads, axis=0), axis=2)

    def bn(o, g, be):
        of = o.reshape(b, C * D)
        mean = of.mean(0)
        var = ((of - mean) ** 2).mean(0)
        of = (of - mean) / jnp.sqrt(var + BN_EPS) * g.reshape(-1) + be.reshape(-1)
        return of.reshape(b, C, D)

    O = bn(O, params["g0"], params["b0"])
    fo = jnp.einsum("bcd,de->bce", O, params["WoT"], precision=prec) + params["bo"][0]
    O = O + jax.nn.relu(fo)
    O = bn(O, params["g1"], params["b1"])
    return O


if __name__ == "__main__":
    # pose is (b, N, num_caps, dim) with num_caps == num_ind (num_seeds);
    # dim=16 (module default), 4 heads.
    D, H = 16, 4
    N, C = 8, 8
    key = jax.random.PRNGKey(0)
    k1, k2, k3 = jax.random.split(key, 3)
    params = init_params(k2, dim=D, num_seeds=C)

    # --- Test 1: module-like tiny shape -> fused single-kernel path (bf16 MXU).
    B = 2
    pose = jax.random.normal(k1, (B, N, C, D), jnp.float32)
    out = jax.block_until_ready(transformer_router_forward(pose, params, num_heads=H))
    ref = reference_forward(pose, params, H, mxu_dtype=jnp.bfloat16)
    assert out.shape == (B, C, D)
    assert bool(jnp.all(jnp.isfinite(out)))
    assert bool(jnp.allclose(out, ref, atol=5e-3, rtol=5e-3)), float(
        jnp.max(jnp.abs(out - ref)))

    # --- Test 2: gridded routing path with batch padding (B=42, tiles of 16).
    B2 = 42
    pose2 = jax.random.normal(k3, (B2, N, C, D), jnp.float32)
    out2 = jax.block_until_ready(
        transformer_router_forward(pose2, params, num_heads=H, max_batch_tile=16))
    ref2 = reference_forward(pose2, params, H, mxu_dtype=jnp.bfloat16)
    assert out2.shape == (B2, C, D)
    assert bool(jnp.all(jnp.isfinite(out2)))
    assert bool(jnp.allclose(out2, ref2, atol=5e-3, rtol=5e-3)), float(
        jnp.max(jnp.abs(out2 - ref2)))

    # --- Test 3: f32-MXU path vs. the exact f32 reference (same gridded path).
    out3 = jax.block_until_ready(
        transformer_router_forward(pose2, params, num_heads=H,
                                   mxu_dtype=jnp.float32, max_batch_tile=16))
    ref3 = reference_forward(pose2, params, H)
    assert bool(jnp.allclose(out3, ref3, atol=5e-3, rtol=5e-3)), float(
        jnp.max(jnp.abs(out3 - ref3)))

    print("KERNEL_OK")
</pallas_src>

<mosaic_0001>
module attributes {stable_mosaic.version = 11 : i64} {
  func.func @_fused_kernel(%arg0: memref<2x8x128xf32, #tpu.memory_space<vmem>>, %arg1: memref<128x256xbf16, #tpu.memory_space<vmem>>, %arg2: memref<1x256xf32, #tpu.memory_space<vmem>>, %arg3: memref<1x128xf32, #tpu.memory_space<vmem>>, %arg4: memref<128x32xf32, #tpu.memory_space<vmem>>, %arg5: memref<1x32xf32, #tpu.memory_space<vmem>>, %arg6: memref<32x128xf32, #tpu.memory_space<vmem>>, %arg7: memref<1x128xf32, #tpu.memory_space<vmem>>, %arg8: memref<1x128xf32, #tpu.memory_space<vmem>>, %arg9: memref<128x128xf32, #tpu.memory_space<vmem>>, %arg10: memref<1x128xf32, #tpu.memory_space<vmem>>, %arg11: memref<1x128xf32, #tpu.memory_space<vmem>>, %arg12: memref<1x128xf32, #tpu.memory_space<vmem>>, %arg13: memref<2x128xf32, #tpu.memory_space<vmem>>) attributes {dimension_semantics = [], scalar_prefetch = 0 : i64, scratch_operands = 0 : i64, tpu.core_type = #tpu.core_type<tc>} {
    %c0 = arith.constant 0 : index
    %c0_0 = arith.constant 0 : index
    %c0_1 = arith.constant 0 : index
    %0 = vector.load %arg0[%c0, %c0_0, %c0_1] : memref<2x8x128xf32, #tpu.memory_space<vmem>>, vector<2x8x128xf32>
    %c0_2 = arith.constant 0 : index
    %c0_3 = arith.constant 0 : index
    %1 = vector.load %arg1[%c0_2, %c0_3] : memref<128x256xbf16, #tpu.memory_space<vmem>>, vector<128x256xbf16>
    %c0_4 = arith.constant 0 : index
    %c0_5 = arith.constant 0 : index
    %2 = vector.load %arg2[%c0_4, %c0_5] : memref<1x256xf32, #tpu.memory_space<vmem>>, vector<1x256xf32>
    %c0_6 = arith.constant 0 : index
    %c0_7 = arith.constant 0 : index
    %3 = vector.load %arg3[%c0_6, %c0_7] : memref<1x128xf32, #tpu.memory_space<vmem>>, vector<1x128xf32>
    %c0_8 = arith.constant 0 : index
    %c0_9 = arith.constant 0 : index
    %4 = vector.load %arg4[%c0_8, %c0_9] : memref<128x32xf32, #tpu.memory_space<vmem>>, vector<128x32xf32>
    %c0_10 = arith.constant 0 : index
    %c0_11 = arith.constant 0 : index
    %5 = vector.load %arg5[%c0_10, %c0_11] : memref<1x32xf32, #tpu.memory_space<vmem>>, vector<1x32xf32>
    %c0_12 = arith.constant 0 : index
    %c0_13 = arith.constant 0 : index
    %6 = vector.load %arg6[%c0_12, %c0_13] : memref<32x128xf32, #tpu.memory_space<vmem>>, vector<32x128xf32>
    %7 = vector.shape_cast %0 : vector<2x8x128xf32> to vector<16x128xf32>
    %8 = arith.truncf %7 : vector<16x128xf32> to vector<16x128xbf16>
    %cst = arith.constant dense<0.000000e+00> : vector<16x256xf32>
    %9 = tpu.matmul %8, %1, %cst {dimension_numbers = #tpu.dot_dimension_numbers<[1], [0], [0], [1], [0, 0, 1, 1], [], []>} : vector<16x128xbf16>, vector<128x256xbf16>, vector<16x256xf32> -> vector<16x256xf32>
    %10 = vector.broadcast %2 : vector<1x256xf32> to vector<16x256xf32>
    %11 = arith.addf %9, %10 : vector<16x256xf32>
    %12 = vector.extract_strided_slice %11 {offsets = [0, 0], sizes = [16, 128], strides = [1, 1]} : vector<16x256xf32> to vector<16x128xf32>
    %13 = vector.extract_strided_slice %11 {offsets = [0, 128], sizes = [16, 128], strides = [1, 1]} : vector<16x256xf32> to vector<16x128xf32>
    %14 = vector.shape_cast %13 : vector<16x128xf32> to vector<2x8x128xf32>
    %15 = vector.broadcast %3 : vector<1x128xf32> to vector<16x128xf32>
    %16 = arith.subf %12, %15 : vector<16x128xf32>
    %17 = arith.mulf %16, %16 : vector<16x128xf32>
    %cst_14 = arith.constant dense<0.000000e+00> : vector<16x32xf32>
    %18 = tpu.matmul %17, %4, %cst_14 {dimension_numbers = #tpu.dot_dimension_numbers<[1], [0], [0], [1], [0, 0, 1, 1], [], []>} : vector<16x128xf32>, vector<128x32xf32>, vector<16x32xf32> -> vector<16x32xf32>
    %19 = vector.broadcast %5 : vector<1x32xf32> to vector<16x32xf32>
    %20 = arith.addf %18, %19 : vector<16x32xf32>
    %21 = vector.shape_cast %20 : vector<16x32xf32> to vector<2x8x32xf32>
    %cst_15 = arith.constant dense<0xFF800000> : vector<2x32xf32>
    %22 = vector.multi_reduction <maximumf>, %21, %cst_15 [1] : vector<2x8x32xf32> to vector<2x32xf32>
    %23 = vector.shape_cast %22 : vector<2x32xf32> to vector<2x1x32xf32>
    %24 = vector.broadcast %23 : vector<2x1x32xf32> to vector<2x8x32xf32>
    %25 = arith.subf %21, %24 : vector<2x8x32xf32>
    %26 = math.exp %25 : vector<2x8x32xf32>
    %cst_16 = arith.constant dense<0.000000e+00> : vector<2x32xf32>
    %27 = vector.multi_reduction <add>, %26, %cst_16 [1] : vector<2x8x32xf32> to vector<2x32xf32>
    %28 = tpu.reciprocal %27 : vector<2x32xf32> -> vector<2x32xf32>
    %29 = vector.shape_cast %26 : vector<2x8x32xf32> to vector<16x32xf32>
    %cst_17 = arith.constant dense<0.000000e+00> : vector<16x128xf32>
    %30 = tpu.matmul %29, %6, %cst_17 {dimension_numbers = #tpu.dot_dimension_numbers<[1], [0], [0], [1], [0, 0, 1, 1], [], []>} : vector<16x32xf32>, vector<32x128xf32>, vector<16x128xf32> -> vector<16x128xf32>
    %31 = vector.shape_cast %30 : vector<16x128xf32> to vector<2x8x128xf32>
    %32 = arith.mulf %31, %14 : vector<2x8x128xf32>
    %cst_18 = arith.constant dense<0.000000e+00> : vector<2x128xf32>
    %33 = vector.multi_reduction <add>, %32, %cst_18 [1] : vector<2x8x128xf32> to vector<2x128xf32>
    %cst_19 = arith.constant dense<0.000000e+00> : vector<2x128xf32>
    %34 = tpu.matmul %28, %6, %cst_19 {dimension_numbers = #tpu.dot_dimension_numbers<[1], [0], [0], [1], [0, 0, 1, 1], [], []>} : vector<2x32xf32>, vector<32x128xf32>, vector<2x128xf32> -> vector<2x128xf32>
    %35 = arith.mulf %33, %34 : vector<2x128xf32>
    %36 = vector.broadcast %3 : vector<1x128xf32> to vector<2x128xf32>
    %37 = arith.addf %36, %35 : vector<2x128xf32>
    %c0_20 = arith.constant 0 : index
    %c0_21 = arith.constant 0 : index
    %38 = vector.load %arg7[%c0_20, %c0_21] : memref<1x128xf32, #tpu.memory_space<vmem>>, vector<1x128xf32>
    %c0_22 = arith.constant 0 : index
    %c0_23 = arith.constant 0 : index
    %39 = vector.load %arg8[%c0_22, %c0_23] : memref<1x128xf32, #tpu.memory_space<vmem>>, vector<1x128xf32>
    %c0_24 = arith.constant 0 : index
    %c0_25 = arith.constant 0 : index
    %40 = vector.load %arg9[%c0_24, %c0_25] : memref<128x128xf32, #tpu.memory_space<vmem>>, vector<128x128xf32>
    %c0_26 = arith.constant 0 : index
    %c0_27 = arith.constant 0 : index
    %41 = vector.load %arg10[%c0_26, %c0_27] : memref<1x128xf32, #tpu.memory_space<vmem>>, vector<1x128xf32>
    %c0_28 = arith.constant 0 : index
    %c0_29 = arith.constant 0 : index
    %42 = vector.load %arg11[%c0_28, %c0_29] : memref<1x128xf32, #tpu.memory_space<vmem>>, vector<1x128xf32>
    %c0_30 = arith.constant 0 : index
    %c0_31 = arith.constant 0 : index
    %43 = vector.load %arg12[%c0_30, %c0_31] : memref<1x128xf32, #tpu.memory_space<vmem>>, vector<1x128xf32>
    %cst_32 = arith.constant dense<0.000000e+00> : vector<128xf32>
    %44 = vector.multi_reduction <add>, %37, %cst_32 [0] : vector<2x128xf32> to vector<128xf32>
    %45 = vector.shape_cast %44 : vector<128xf32> to vector<1x128xf32>
    %cst_33 = arith.constant 2.000000e+00 : f32
    %46 = vector.broadcast %cst_33 : f32 to vector<1x128xf32>
    %47 = arith.divf %45, %46 : vector<1x128xf32>
    %48 = vector.broadcast %47 : vector<1x128xf32> to vector<2x128xf32>
    %49 = arith.subf %37, %48 : vector<2x128xf32>
    %50 = vector.broadcast %47 : vector<1x128xf32> to vector<2x128xf32>
    %51 = arith.subf %37, %50 : vector<2x128xf32>
    %52 = arith.mulf %49, %51 : vector<2x128xf32>
    %cst_34 = arith.constant dense<0.000000e+00> : vector<128xf32>
    %53 = vector.multi_reduction <add>, %52, %cst_34 [0] : vector<2x128xf32> to vector<128xf32>
    %54 = vector.shape_cast %53 : vector<128xf32> to vector<1x128xf32>
    %cst_35 = arith.constant 2.000000e+00 : f32
    %55 = vector.broadcast %cst_35 : f32 to vector<1x128xf32>
    %56 = arith.divf %54, %55 : vector<1x128xf32>
    %57 = vector.broadcast %47 : vector<1x128xf32> to vector<2x128xf32>
    %58 = arith.subf %37, %57 : vector<2x128xf32>
    %cst_36 = arith.constant 9.99999974E-6 : f32
    %59 = vector.broadcast %cst_36 : f32 to vector<1x128xf32>
    %60 = arith.addf %56, %59 : vector<1x128xf32>
    %61 = math.rsqrt %60 : vector<1x128xf32>
    %62 = vector.broadcast %61 : vector<1x128xf32> to vector<2x128xf32>
    %63 = arith.mulf %58, %62 : vector<2x128xf32>
    %64 = vector.broadcast %38 : vector<1x128xf32> to vector<2x128xf32>
    %65 = arith.mulf %63, %64 : vector<2x128xf32>
    %66 = vector.broadcast %39 : vector<1x128xf32> to vector<2x128xf32>
    %67 = arith.addf %65, %66 : vector<2x128xf32>
    %cst_37 = arith.constant dense<0.000000e+00> : vector<2x128xf32>
    %68 = tpu.matmul %67, %40, %cst_37 {dimension_numbers = #tpu.dot_dimension_numbers<[1], [0], [0], [1], [0, 0, 1, 1], [], []>} : vector<2x128xf32>, vector<128x128xf32>, vector<2x128xf32> -> vector<2x128xf32>
    %69 = vector.broadcast %41 : vector<1x128xf32> to vector<2x128xf32>
    %70 = arith.addf %68, %69 : vector<2x128xf32>
    %cst_38 = arith.constant 0.000000e+00 : f32
    %71 = vector.broadcast %cst_38 : f32 to vector<2x128xf32>
    %72 = arith.maximumf %70, %71 : vector<2x128xf32>
    %73 = arith.addf %67, %72 : vector<2x128xf32>
    %cst_39 = arith.constant dense<0.000000e+00> : vector<128xf32>
    %74 = vector.multi_reduction <add>, %73, %cst_39 [0] : vector<2x128xf32> to vector<128xf32>
    %75 = vector.shape_cast %74 : vector<128xf32> to vector<1x128xf32>
    %cst_40 = arith.constant 2.000000e+00 : f32
    %76 = vector.broadcast %cst_40 : f32 to vector<1x128xf32>
    %77 = arith.divf %75, %76 : vector<1x128xf32>
    %78 = vector.broadcast %77 : vector<1x128xf32> to vector<2x128xf32>
    %79 = arith.subf %73, %78 : vector<2x128xf32>
    %80 = vector.broadcast %77 : vector<1x128xf32> to vector<2x128xf32>
    %81 = arith.subf %73, %80 : vector<2x128xf32>
    %82 = arith.mulf %79, %81 : vector<2x128xf32>
    %cst_41 = arith.constant dense<0.000000e+00> : vector<128xf32>
    %83 = vector.multi_reduction <add>, %82, %cst_41 [0] : vector<2x128xf32> to vector<128xf32>
    %84 = vector.shape_cast %83 : vector<128xf32> to vector<1x128xf32>
    %cst_42 = arith.constant 2.000000e+00 : f32
    %85 = vector.broadcast %cst_42 : f32 to vector<1x128xf32>
    %86 = arith.divf %84, %85 : vector<1x128xf32>
    %87 = vector.broadcast %77 : vector<1x128xf32> to vector<2x128xf32>
    %88 = arith.subf %73, %87 : vector<2x128xf32>
    %cst_43 = arith.constant 9.99999974E-6 : f32
    %89 = vector.broadcast %cst_43 : f32 to vector<1x128xf32>
    %90 = arith.addf %86, %89 : vector<1x128xf32>
    %91 = math.rsqrt %90 : vector<1x128xf32>
    %92 = vector.broadcast %91 : vector<1x128xf32> to vector<2x128xf32>
    %93 = arith.mulf %88, %92 : vector<2x128xf32>
    %94 = vector.broadcast %42 : vector<1x128xf32> to vector<2x128xf32>
    %95 = arith.mulf %93, %94 : vector<2x128xf32>
    %96 = vector.broadcast %43 : vector<1x128xf32> to vector<2x128xf32>
    %97 = arith.addf %95, %96 : vector<2x128xf32>
    %c0_44 = arith.constant 0 : index
    %c0_45 = arith.constant 0 : index
    %98 = vector.load %arg13[%c0_44, %c0_45] : memref<2x128xf32, #tpu.memory_space<vmem>>, vector<2x128xf32>
    tpu.vector_store %arg13[%c0_44, %c0_45], %97 {strides = array<i32>} : memref<2x128xf32, #tpu.memory_space<vmem>>, vector<2x128xf32>,
    return
  }
}

</mosaic_0001>

<llo_original>
// kernel: tpu_custom_call.1
$region0: #{tpu_custom_call.1}
  #allocation0 [shape = 'u32[]', space=smem, size = 0x4, offset = 0x4, fixed_abs, tag = 'smem constant byte address 0x4 - core index']
  #allocation1 [shape = 'u32[144,128]{1,0:T(1,128)}', space=vmem, size = 0x12000, scoped, tag = 'internal scratch']
  %s0 = inlined_call_operand.hbm [shape: f32[2,8,128], index: 0, kind: input, shape index: {}]
  %s1 = inlined_call_operand.vmem [shape: bf16[128,256], index: 1, kind: input, shape index: {}]
  %s2 = inlined_call_operand.vmem [shape: f32[1,256], index: 2, kind: input, shape index: {}]
  %s3 = inlined_call_operand.vmem [shape: f32[1,128], index: 3, kind: input, shape index: {}]
  %s4 = inlined_call_operand.vmem [shape: f32[128,32], index: 4, kind: input, shape index: {}]
  %s5 = inlined_call_operand.vmem [shape: f32[1,32], index: 5, kind: input, shape index: {}]
  %s6 = inlined_call_operand.vmem [shape: f32[32,128], index: 6, kind: input, shape index: {}]
  %s7 = inlined_call_operand.vmem [shape: f32[1,128], index: 7, kind: input, shape index: {}]
  %s8 = inlined_call_operand.vmem [shape: f32[1,128], index: 8, kind: input, shape index: {}]
  %s9 = inlined_call_operand.hbm [shape: f32[128,128], index: 9, kind: input, shape index: {}]
  %s10 = inlined_call_operand.vmem [shape: f32[1,128], index: 10, kind: input, shape index: {}]
  %s11 = inlined_call_operand.vmem [shape: f32[1,128], index: 11, kind: input, shape index: {}]
  %s12 = inlined_call_operand.vmem [shape: f32[1,128], index: 12, kind: input, shape index: {}]
  %s13 = inlined_call_operand.hbm [shape: f32[2,128], index: 13, kind: output, shape index: {}]
  %s14 = sld [smem:[#allocation0]]
  $region70: #{tpu_custom_call.1} parent=0
    _
  %s16 = ssub.s32 1, %s14
  %s17 = scalar_select 0, %s16, %s14
  $region1: #{tpu_custom_call.1} parent=0
    #allocation2 [shape = 'u8[8192]{0}', space=vmem, size = 0x2000, scoped, tag = 'input window, operand 0, single buffered']
    #allocation3 [shape = 's32[1]{0}', space=sflag, size = 0x4, scoped, tag = 'scoped memory for tpu_custom_call.1']
    #allocation4 [shape = 's32[1]{0}', space=sflag, size = 0x4, scoped, tag = 'scoped memory for tpu_custom_call.1']
    #allocation5 [shape = 'u8[65536]{0}', space=vmem, size = 0x10000, scoped, tag = 'input window, operand 9, single buffered']
    #allocation6 [shape = 's32[1]{0}', space=sflag, size = 0x4, scoped, tag = 'scoped memory for tpu_custom_call.1']
    #allocation7 [shape = 'u8[1024]{0}', space=vmem, size = 0x400, scoped, tag = 'output window, operand 0, single buffered']
    %18 = vsyncpa [#allocation3], 0
    %19 = vsyncpa [#allocation6], 0
    %20 = vsyncpa [#allocation4], 0
    // Predicated region
    $region2: #{tpu_custom_call.1} parent=1 // pred_check
      _
    $region3: #{tpu_custom_call.1} parent=1 // pred_check_branch
      %22 = sbr.rel (0) target = $region5
    $region4: #{tpu_custom_call.1} parent=1 // pred_region
      %s24 = ssub.s32 256, 256
      %25 = vsyncadd [#allocation3], %s24
      %s26 = sshll.u32 [#allocation2], 4
      %s27 = int_to_ptr.vmem [resolvable:$true] %s26
      %32 = dma.hbm_to_vmem [thread:$0]  %s0, 256, %s27, [#allocation3], 128, 128, 8
    $region5: #{tpu_custom_call.1} parent=1 // pred_fallthru
      _
    // Predicated region
    $region6: #{tpu_custom_call.1} parent=1 // pred_check
      _
    $region7: #{tpu_custom_call.1} parent=1 // pred_check_branch
      %34 = sbr.rel (0) target = $region9
    $region8: #{tpu_custom_call.1} parent=1 // pred_region
      _
    $region9: #{tpu_custom_call.1} parent=1 // pred_fallthru
      _
    // Predicated region
    $region10: #{tpu_custom_call.1} parent=1 // pred_check
      _
    $region11: #{tpu_custom_call.1} parent=1 // pred_check_branch
      %36 = sbr.rel (0) target = $region13
    $region12: #{tpu_custom_call.1} parent=1 // pred_region
      _
    $region13: #{tpu_custom_call.1} parent=1 // pred_fallthru
      _
    // Predicated region
    $region14: #{tpu_custom_call.1} parent=1 // pred_check
      _
    $region15: #{tpu_custom_call.1} parent=1 // pred_check_branch
      %38 = sbr.rel (0) target = $region17
    $region16: #{tpu_custom_call.1} parent=1 // pred_region
      _
    $region17: #{tpu_custom_call.1} parent=1 // pred_fallthru
      _
    // Predicated region
    $region18: #{tpu_custom_call.1} parent=1 // pred_check
      _
    $region19: #{tpu_custom_call.1} parent=1 // pred_check_branch
      %40 = sbr.rel (0) target = $region21
    $region20: #{tpu_custom_call.1} parent=1 // pred_region
      _
    $region21: #{tpu_custom_call.1} parent=1 // pred_fallthru
      _
    // Predicated region
    $region22: #{tpu_custom_call.1} parent=1 // pred_check
      _
    $region23: #{tpu_custom_call.1} parent=1 // pred_check_branch
      %42 = sbr.rel (0) target = $region25
    $region24: #{tpu_custom_call.1} parent=1 // pred_region
      _
    $region25: #{tpu_custom_call.1} parent=1 // pred_fallthru
      _
    // Predicated region
    $region26: #{tpu_custom_call.1} parent=1 // pred_check
      _
    $region27: #{tpu_custom_call.1} parent=1 // pred_check_branch
      %44 = sbr.rel (0) target = $region29
    $region28: #{tpu_custom_call.1} parent=1 // pred_region
      _
    $region29: #{tpu_custom_call.1} parent=1 // pred_fallthru
      _
    // Predicated region
    $region30: #{tpu_custom_call.1} parent=1 // pred_check
      _
    $region31: #{tpu_custom_call.1} parent=1 // pred_check_branch
      %46 = sbr.rel (0) target = $region33
    $region32: #{tpu_custom_call.1} parent=1 // pred_region
      _
    $region33: #{tpu_custom_call.1} parent=1 // pred_fallthru
      _
    // Predicated region
    $region34: #{tpu_custom_call.1} parent=1 // pred_check
      _
    $region35: #{tpu_custom_call.1} parent=1 // pred_check_branch
      %48 = sbr.rel (0) target = $region37
    $region36: #{tpu_custom_call.1} parent=1 // pred_region
      _
    $region37: #{tpu_custom_call.1} parent=1 // pred_fallthru
      _
    // Predicated region
    $region38: #{tpu_custom_call.1} parent=1 // pred_check
      _
    $region39: #{tpu_custom_call.1} parent=1 // pred_check_branch
      %50 = sbr.rel (0) target = $region41
    $region40: #{tpu_custom_call.1} parent=1 // pred_region
      %s52 = ssub.s32 2048, 2048
      %53 = vsyncadd [#allocation6], %s52
      %s54 = sshll.u32 [#allocation5], 4
      %s55 = int_to_ptr.vmem [resolvable:$true] %s54
      %60 = dma.hbm_to_vmem [thread:$0]  %s9, 2048, %s55, [#allocation6], 128, 128, 8
    $region41: #{tpu_custom_call.1} parent=1 // pred_fallthru
      _
    // Predicated region
    $region42: #{tpu_custom_call.1} parent=1 // pred_check
      _
    $region43: #{tpu_custom_call.1} parent=1 // pred_check_branch
      %62 = sbr.rel (0) target = $region45
    $region44: #{tpu_custom_call.1} parent=1 // pred_region
      _
    $region45: #{tpu_custom_call.1} parent=1 // pred_fallthru
      _
    // Predicated region
    $region46: #{tpu_custom_call.1} parent=1 // pred_check
      _
    $region47: #{tpu_custom_call.1} parent=1 // pred_check_branch
      %64 = sbr.rel (0) target = $region49
    $region48: #{tpu_custom_call.1} parent=1 // pred_region
      _
    $region49: #{tpu_custom_call.1} parent=1 // pred_fallthru
      _
    // Predicated region
    $region50: #{tpu_custom_call.1} parent=1 // pred_check
      _
    $region51: #{tpu_custom_call.1} parent=1 // pred_check_branch
      %66 = sbr.rel (0) target = $region53
    $region52: #{tpu_custom_call.1} parent=1 // pred_region
      _
    $region53: #{tpu_custom_call.1} parent=1 // pred_fallthru
      _
    // Predicated region
    $region54: #{tpu_custom_call.1} parent=1 // pred_check
      _
    $region55: #{tpu_custom_call.1} parent=1 // pred_check_branch
      %68 = sbr.rel (0) target = $region57
    $region56: #{tpu_custom_call.1} parent=1 // pred_region
      %69 = dma.done [#allocation3], 256
    $region57: #{tpu_custom_call.1} parent=1 // pred_fallthru
      _
    // Predicated region
    $region58: #{tpu_custom_call.1} parent=1 // pred_check
      _
    $region59: #{tpu_custom_call.1} parent=1 // pred_check_branch
      %71 = sbr.rel (0) target = $region61
    $region60: #{tpu_custom_call.1} parent=1 // pred_region
      %72 = dma.done [#allocation6], 2048
    $region61: #{tpu_custom_call.1} parent=1 // pred_fallthru
      _
    %v74 = vld [vmem:[#allocation2] sm:$0xff]
    %v75 = vld [vmem:[#allocation2 + $0x8] sm:$0xff]
    %v76 = vld [vmem:[%s1] sm:$0xff]
    %v77 = vld [vmem:[%s1 + $0x8] sm:$0xff]
    %v78 = vld [vmem:[%s1 + $0x10] sm:$0xff]
    %v79 = vld [vmem:[%s1 + $0x18] sm:$0xff]
    %v80 = vld [vmem:[%s1 + $0x20] sm:$0xff]
    %v81 = vld [vmem:[%s1 + $0x28] sm:$0xff]
    %v82 = vld [vmem:[%s1 + $0x30] sm:$0xff]
    %v83 = vld [vmem:[%s1 + $0x38] sm:$0xff]
    %v84 = vld [vmem:[%s1 + $0x40] sm:$0xff]
    %v85 = vld [vmem:[%s1 + $0x48] sm:$0xff]
    %v86 = vld [vmem:[%s1 + $0x50] sm:$0xff]
    %v87 = vld [vmem:[%s1 + $0x58] sm:$0xff]
    %v88 = vld [vmem:[%s1 + $0x60] sm:$0xff]
    %v89 = vld [vmem:[%s1 + $0x68] sm:$0xff]
    %v90 = vld [vmem:[%s1 + $0x70] sm:$0xff]
    %v91 = vld [vmem:[%s1 + $0x78] sm:$0xff]
    %v92 = vld [vmem:[%s2] sm:$0x3]
    %v93 = vld [vmem:[%s3] sm:$0x1]
    %v94 = vld [vmem:[%s4] sm:$0xff]
    %v95 = vld [vmem:[%s4 + $0x8] sm:$0xff]
    %v96 = vld [vmem:[%s4 + $0x10] sm:$0xff]
    %v97 = vld [vmem:[%s4 + $0x18] sm:$0xff]
    %v98 = vld [vmem:[%s4 + $0x20] sm:$0xff]
    %v99 = vld [vmem:[%s4 + $0x28] sm:$0xff]
    %v100 = vld [vmem:[%s4 + $0x30] sm:$0xff]
    %v101 = vld [vmem:[%s4 + $0x38] sm:$0xff]
    %v102 = vld [vmem:[%s4 + $0x40] sm:$0xff]
    %v103 = vld [vmem:[%s4 + $0x48] sm:$0xff]
    %v104 = vld [vmem:[%s4 + $0x50] sm:$0xff]
    %v105 = vld [vmem:[%s4 + $0x58] sm:$0xff]
    %v106 = vld [vmem:[%s4 + $0x60] sm:$0xff]
    %v107 = vld [vmem:[%s4 + $0x68] sm:$0xff]
    %v108 = vld [vmem:[%s4 + $0x70] sm:$0xff]
    %v109 = vld [vmem:[%s4 + $0x78] sm:$0xff]
    %v110 = vld [vmem:[%s5] sm:$0x1]
    %v111 = vld [vmem:[%s6] sm:$0xff]
    %v112 = vld [vmem:[%s6 + $0x8] sm:$0xff]
    %v113 = vld [vmem:[%s6 + $0x10] sm:$0xff]
    %v114 = vld [vmem:[%s6 + $0x18] sm:$0xff]
    %v115 = vpack.c.bf16 %v75, %v74
    %v117 = vlaneseq
    %v118 = vshrl.u32 %v117, 7
    %v119 = vsub.s32 0, %v118
    %v120 = vrot.slane %v92, %v119
    %v121 = vlaneseq
    %v122 = vshrl.u32 %v121, 7
    %v123 = vsub.s32 1, %v122
    %v124 = vrot.slane %v92, %v123
    %v143 = vunpack.c.l.b16 %v76
    %v144 = vunpack.c.h.b16 %v76
    %v145 = vunpack.c.l.b16 %v77
    %v146 = vunpack.c.h.b16 %v77
    %v147 = vunpack.c.l.b16 %v78
    %v148 = vunpack.c.h.b16 %v78
    %v149 = vunpack.c.l.b16 %v79
    %v150 = vunpack.c.h.b16 %v79
    %v151 = vunpack.c.l.b16 %v80
    %v152 = vunpack.c.h.b16 %v80
    %v153 = vunpack.c.l.b16 %v81
    %v154 = vunpack.c.h.b16 %v81
    %v155 = vunpack.c.l.b16 %v82
    %v156 = vunpack.c.h.b16 %v82
    %v157 = vunpack.c.l.b16 %v83
    %v158 = vunpack.c.h.b16 %v83
    %v159 = vunpack.c.l.b16 %v84
    %v160 = vunpack.c.h.b16 %v84
    %v161 = vunpack.c.l.b16 %v85
    %v162 = vunpack.c.h.b16 %v85
    %v163 = vunpack.c.l.b16 %v86
    %v164 = vunpack.c.h.b16 %v86
    %v165 = vunpack.c.l.b16 %v87
    %v166 = vunpack.c.h.b16 %v87
    %v167 = vunpack.c.l.b16 %v88
    %v168 = vunpack.c.h.b16 %v88
    %v169 = vunpack.c.l.b16 %v89
    %v170 = vunpack.c.h.b16 %v89
    %v171 = vunpack.c.l.b16 %v90
    %v172 = vunpack.c.h.b16 %v90
    %v173 = vunpack.c.l.b16 %v91
    %v174 = vunpack.c.h.b16 %v91
    %v175 = vpack.c.b16 %v145, %v143
    %v176 = vpack.c.b16 %v146, %v144
    %v177 = vpack.c.b16 %v149, %v147
    %v178 = vpack.c.b16 %v150, %v148
    %v179 = vpack.c.b16 %v153, %v151
    %v180 = vpack.c.b16 %v154, %v152
    %v181 = vpack.c.b16 %v157, %v155
    %v182 = vpack.c.b16 %v158, %v156
    %v183 = vpack.c.b16 %v161, %v159
    %v184 = vpack.c.b16 %v162, %v160
    %v185 = vpack.c.b16 %v165, %v163
    %v186 = vpack.c.b16 %v166, %v164
    %v187 = vpack.c.b16 %v169, %v167
    %v188 = vpack.c.b16 %v170, %v168
    %v189 = vpack.c.b16 %v173, %v171
    %v190 = vpack.c.b16 %v174, %v172
    %207 = vmatprep.subr.bf16.mxu0 %v176
    %208 = vmatpush1.bf16.msra.mxu0 %v175
    %209 = vmatprep.subr.bf16.mxu0 %v178
    %210 = vmatpush1.bf16.msra.mxu0 %v177
    %211 = vmatprep.subr.bf16.mxu0 %v180
    %212 = vmatpush1.bf16.msra.mxu0 %v179
    %213 = vmatprep.subr.bf16.mxu0 %v182
    %214 = vmatpush1.bf16.msra.mxu0 %v181
    %215 = vmatprep.subr.bf16.mxu0 %v184
    %216 = vmatpush1.bf16.msra.mxu0 %v183
    %217 = vmatprep.subr.bf16.mxu0 %v186
    %218 = vmatpush1.bf16.msra.mxu0 %v185
    %219 = vmatprep.subr.bf16.mxu0 %v188
    %220 = vmatpush1.bf16.msra.mxu0 %v187
    %221 = vmatprep.subr.bf16.mxu0 %v190
    %222 = vmatpush1.bf16.msra.mxu0 %v189
    %223 = vmatprep.subr.bf16.mxu0 0
    %224 = vmatpush1.bf16.msra.mxu0 0
    %225 = vmatprep.subr.bf16.mxu0 0
    %226 = vmatpush1.bf16.msra.mxu0 0
    %227 = vmatprep.subr.bf16.mxu0 0
    %228 = vmatpush1.bf16.msra.mxu0 0
    %229 = vmatprep.subr.bf16.mxu0 0
    %230 = vmatpush1.bf16.msra.mxu0 0
    %231 = vmatprep.subr.bf16.mxu0 0
    %232 = vmatpush1.bf16.msra.mxu0 0
    %233 = vmatprep.subr.bf16.mxu0 0
    %234 = vmatpush1.bf16.msra.mxu0 0
    %235 = vmatprep.subr.bf16.mxu0 0
    %236 = vmatpush1.bf16.msra.mxu0 0
    %237 = vmatprep.subr.bf16.mxu0 0
    %238 = vmatpush1.bf16.msra.mxu0 0
    %239 = vmatprep.mubr.bf16.mxu0 0
    %240 = vmatmul.mubr.bf16.gmra.mrb[0].mxu0 %v115
    %v241 = vpop.f32.mrb[0].mxu0
    %v242 = vadd.f32 %v120, %v241
    %v243 = vpop.f32.mrb[0].mxu0
    %v244 = vadd.f32 %v124, %v243
    %v245 = vpop.f32.mrb[0].mxu0
    %v246 = vadd.f32 %v120, %v245
    %v247 = vpop.f32.mrb[0].mxu0
    %v248 = vadd.f32 %v124, %v247
    %249 = vdwg.mxu0
    %v251 = vlaneseq
    %v252 = vshrl.u32 %v251, 7
    %v253 = vsub.s32 0, %v252
    %v254 = vrot.slane %v93, %v253
    %v256 = vsub.f32 %v242, %v254
    %v257 = vsub.f32 %v246, %v254
    %v258 = vmul.f32 %v256, %v256
    %v259 = vmul.f32 %v257, %v257
    %v261 = vlaneseq
    %v262 = vshrl.u32 %v261, 7
    %v263 = vsub.s32 0, %v262
    %v264 = vrot.slane %v110, %v263
    %266 = vmatprep.subr.mxu0 0.0
    %267 = vmatpush1.msra.mxu0 %v94
    %268 = vmatprep.subr.mxu0 0.0
    %269 = vmatpush1.msra.mxu0 %v95
    %270 = vmatprep.subr.mxu0 0.0
    %271 = vmatpush1.msra.mxu0 %v96
    %272 = vmatprep.subr.mxu0 0.0
    %273 = vmatpush1.msra.mxu0 %v97
    %274 = vmatprep.subr.mxu0 0.0
    %275 = vmatpush1.msra.mxu0 %v98
    %276 = vmatprep.subr.mxu0 0.0
    %277 = vmatpush1.msra.mxu0 %v99
    %278 = vmatprep.subr.mxu0 0.0
    %279 = vmatpush1.msra.mxu0 %v100
    %280 = vmatprep.subr.mxu0 0.0
    %281 = vmatpush1.msra.mxu0 %v101
    %282 = vmatprep.subr.mxu0 0.0
    %283 = vmatpush1.msra.mxu0 %v102
    %284 = vmatprep.subr.mxu0 0.0
    %285 = vmatpush1.msra.mxu0 %v103
    %286 = vmatprep.subr.mxu0 0.0
    %287 = vmatpush1.msra.mxu0 %v104
    %288 = vmatprep.subr.mxu0 0.0
    %289 = vmatpush1.msra.mxu0 %v105
    %290 = vmatprep.subr.mxu0 0.0
    %291 = vmatpush1.msra.mxu0 %v106
    %292 = vmatprep.subr.mxu0 0.0
    %293 = vmatpush1.msra.mxu0 %v107
    %294 = vmatprep.subr.mxu0 0.0
    %295 = vmatpush1.msra.mxu0 %v108
    %296 = vmatprep.subr.mxu0 0.0
    %297 = vmatpush1.msra.mxu0 %v109
    %298 = vmatprep.subr.mxu0 0.0
    %299 = vmatpush1.msra.mxu0 0.0
    %300 = vmatprep.subr.mxu0 0.0
    %301 = vmatpush1.msra.mxu0 0.0
    %302 = vmatprep.subr.mxu0 0.0
    %303 = vmatpush1.msra.mxu0 0.0
    %304 = vmatprep.subr.mxu0 0.0
    %305 = vmatpush1.msra.mxu0 0.0
    %306 = vmatprep.subr.mxu0 0.0
    %307 = vmatpush1.msra.mxu0 0.0
    %308 = vmatprep.subr.mxu0 0.0
    %309 = vmatpush1.msra.mxu0 0.0
    %310 = vmatprep.subr.mxu0 0.0
    %311 = vmatpush1.msra.mxu0 0.0
    %312 = vmatprep.subr.mxu0 0.0
    %313 = vmatpush1.msra.mxu0 0.0
    %314 = vmatprep.subr.mxu0 0.0
    %315 = vmatpush1.msra.mxu0 0.0
    %316 = vmatprep.subr.mxu0 0.0
    %317 = vmatpush1.msra.mxu0 0.0
    %318 = vmatprep.subr.mxu0 0.0
    %319 = vmatpush1.msra.mxu0 0.0
    %320 = vmatprep.subr.mxu0 0.0
    %321 = vmatpush1.msra.mxu0 0.0
    %322 = vmatprep.subr.mxu0 0.0
    %323 = vmatpush1.msra.mxu0 0.0
    %324 = vmatprep.subr.mxu0 0.0
    %325 = vmatpush1.msra.mxu0 0.0
    %326 = vmatprep.subr.mxu0 0.0
    %327 = vmatpush1.msra.mxu0 0.0
    %328 = vmatprep.subr.mxu0 0.0
    %329 = vmatpush1.msra.mxu0 0.0
    %330 = vmatprep.mubr.f32.mxu0 0.0
    %331 = vmatmul.mubr.f32.gmra.mrb[0].mxu0 %v258
    %v332 = vpop.f32.mrb[0].mxu0
    %v333 = vadd.f32 %v264, %v332
    %v334 = vpop.f32.mrb[0].mxu0
    %335 = vmatprep.mubr.f32.mxu0 0.0
    %336 = vmatmul.mubr.f32.gmra.mrb[0].mxu0 %v259
    %v337 = vpop.f32.mrb[0].mxu0
    %v338 = vadd.f32 %v264, %v337
    %v339 = vpop.f32.mrb[0].mxu0
    %340 = vdwg.mxu0
    %vm341 = vcmask 261120
    %v342 = vsel %vm341, %v333, -inf
    %v343 = vrot.slane %v342, 4
    %v344 = vmax.f32 %v342, %v343
    %v345 = vrot.slane %v344, 2
    %v346 = vmax.f32 %v344, %v345
    %v347 = vrot.slane %v346, 1
    %v348 = vmax.f32 %v346, %v347
    %v349 = vsel %vm341, %v338, -inf
    %v350 = vrot.slane %v349, 4
    %v351 = vmax.f32 %v349, %v350
    %v352 = vrot.slane %v351, 2
    %v353 = vmax.f32 %v351, %v352
    %v354 = vrot.slane %v353, 1
    %v355 = vmax.f32 %v353, %v354
    %v356 = vsub.f32 %v333, %v348
    %v357 = vsub.f32 %v338, %v355
    %v358 = vmul.f32 %v356, 1.442695
    %v359 = vpow.pop %v358
    %v360 = vmul.f32 %v357, 1.442695
    %v361 = vpow.pop %v360
    %v362 = vsel %vm341, %v359, 0.0
    %v363 = vrot.slane %v362, 4
    %v364 = vadd.f32 %v362, %v363
    %v365 = vrot.slane %v364, 2
    %v366 = vadd.f32 %v364, %v365
    %v367 = vrot.slane %v366, 1
    %v368 = vadd.f32 %v366, %v367
    %v369 = vsel %vm341, %v361, 0.0
    %v370 = vrot.slane %v369, 4
    %v371 = vadd.f32 %v369, %v370
    %v372 = vrot.slane %v371, 2
    %v373 = vadd.f32 %v371, %v372
    %v374 = vrot.slane %v373, 1
    %v375 = vadd.f32 %v373, %v374
    %v376 = vrcp.pop %v368
    %v377 = vrcp.pop %v375
    %v379 = vsel %vm341, %v359, 0
    %v382 = vsel %vm341, %v361, 0
    %384 = vmatprep.subr.mxu0 0.0
    %385 = vmatpush1.msra.mxu0 %v111
    %386 = vmatprep.subr.mxu0 0.0
    %387 = vmatpush1.msra.mxu0 %v112
    %388 = vmatprep.subr.mxu0 0.0
    %389 = vmatpush1.msra.mxu0 %v113
    %390 = vmatprep.subr.mxu0 0.0
    %391 = vmatpush1.msra.mxu0 %v114
    %392 = vmatprep.subr.mxu0 0.0
    %393 = vmatpush1.msra.mxu0 0.0
    %394 = vmatprep.subr.mxu0 0.0
    %395 = vmatpush1.msra.mxu0 0.0
    %396 = vmatprep.subr.mxu0 0.0
    %397 = vmatpush1.msra.mxu0 0.0
    %398 = vmatprep.subr.mxu0 0.0
    %399 = vmatpush1.msra.mxu0 0.0
    %400 = vmatprep.subr.mxu0 0.0
    %401 = vmatpush1.msra.mxu0 0.0
    %402 = vmatprep.subr.mxu0 0.0
    %403 = vmatpush1.msra.mxu0 0.0
    %404 = vmatprep.subr.mxu0 0.0
    %405 = vmatpush1.msra.mxu0 0.0
    %406 = vmatprep.subr.mxu0 0.0
    %407 = vmatpush1.msra.mxu0 0.0
    %408 = vmatprep.subr.mxu0 0.0
    %409 = vmatpush1.msra.mxu0 0.0
    %410 = vmatprep.subr.mxu0 0.0
    %411 = vmatpush1.msra.mxu0 0.0
    %412 = vmatprep.subr.mxu0 0.0
    %413 = vmatpush1.msra.mxu0 0.0
    %414 = vmatprep.subr.mxu0 0.0
    %415 = vmatpush1.msra.mxu0 0.0
    %416 = vmatprep.subr.mxu0 0.0
    %417 = vmatpush1.msra.mxu0 0.0
    %418 = vmatprep.subr.mxu0 0.0
    %419 = vmatpush1.msra.mxu0 0.0
    %420 = vmatprep.subr.mxu0 0.0
    %421 = vmatpush1.msra.mxu0 0.0
    %422 = vmatprep.subr.mxu0 0.0
    %423 = vmatpush1.msra.mxu0 0.0
    %424 = vmatprep.subr.mxu0 0.0
    %425 = vmatpush1.msra.mxu0 0.0
    %426 = vmatprep.subr.mxu0 0.0
    %427 = vmatpush1.msra.mxu0 0.0
    %428 = vmatprep.subr.mxu0 0.0
    %429 = vmatpush1.msra.mxu0 0.0
    %430 = vmatprep.subr.mxu0 0.0
    %431 = vmatpush1.msra.mxu0 0.0
    %432 = vmatprep.subr.mxu0 0.0
    %433 = vmatpush1.msra.mxu0 0.0
    %434 = vmatprep.subr.mxu0 0.0
    %435 = vmatpush1.msra.mxu0 0.0
    %436 = vmatprep.subr.mxu0 0.0
    %437 = vmatpush1.msra.mxu0 0.0
    %438 = vmatprep.subr.mxu0 0.0
    %439 = vmatpush1.msra.mxu0 0.0
    %440 = vmatprep.subr.mxu0 0.0
    %441 = vmatpush1.msra.mxu0 0.0
    %442 = vmatprep.subr.mxu0 0.0
    %443 = vmatpush1.msra.mxu0 0.0
    %444 = vmatprep.subr.mxu0 0.0
    %445 = vmatpush1.msra.mxu0 0.0
    %446 = vmatprep.subr.mxu0 0.0
    %447 = vmatpush1.msra.mxu0 0.0
    %448 = vmatprep.mubr.f32.mxu0 0.0
    %449 = vmatmul.mubr.f32.gmra.mrb[0].mxu0 %v379
    %v450 = vpop.f32.mrb[0].mxu0
    %v451 = vadd.f32 0.0, %v450
    %v452 = vpop.f32.mrb[0].mxu0
    %453 = vmatprep.mubr.f32.mxu0 0.0
    %454 = vmatmul.mubr.f32.gmra.mrb[0].mxu0 %v382
    %v455 = vpop.f32.mrb[0].mxu0
    %v456 = vadd.f32 0.0, %v455
    %v457 = vpop.f32.mrb[0].mxu0
    %458 = vdwg.mxu0
    %v459 = vmul.f32 %v451, %v244
    %v460 = vmul.f32 %v456, %v248
    %v461 = vrot.slane %v459, 4
    %v462 = vadd.f32 %v459, %v461
    %v463 = vrot.slane %v462, 2
    %v464 = vadd.f32 %v462, %v463
    %v465 = vrot.slane %v464, 1
    %v466 = vadd.f32 %v464, %v465
    %v467 = vrot.slane %v460, 4
    %v468 = vadd.f32 %v460, %v467
    %v469 = vrot.slane %v468, 2
    %v470 = vadd.f32 %v468, %v469
    %v471 = vrot.slane %v470, 1
    %v472 = vadd.f32 %v470, %v471
    %vm475 = vcmask 1041409
    %v476 = vsel %vm475, %v377, %v376
    %v477 = vsel %vm341, %v476, 0
    %479 = vmatprep.subr.mxu0 0.0
    %480 = vmatpush1.msra.mxu0 %v111
    %481 = vmatprep.subr.mxu0 0.0
    %482 = vmatpush1.msra.mxu0 %v112
    %483 = vmatprep.subr.mxu0 0.0
    %484 = vmatpush1.msra.mxu0 %v113
    %485 = vmatprep.subr.mxu0 0.0
    %486 = vmatpush1.msra.mxu0 %v114
    %487 = vmatprep.subr.mxu0 0.0
    %488 = vmatpush1.msra.mxu0 0.0
    %489 = vmatprep.subr.mxu0 0.0
    %490 = vmatpush1.msra.mxu0 0.0
    %491 = vmatprep.subr.mxu0 0.0
    %492 = vmatpush1.msra.mxu0 0.0
    %493 = vmatprep.subr.mxu0 0.0
    %494 = vmatpush1.msra.mxu0 0.0
    %495 = vmatprep.subr.mxu0 0.0
    %496 = vmatpush1.msra.mxu0 0.0
    %497 = vmatprep.subr.mxu0 0.0
    %498 = vmatpush1.msra.mxu0 0.0
    %499 = vmatprep.subr.mxu0 0.0
    %500 = vmatpush1.msra.mxu0 0.0
    %501 = vmatprep.subr.mxu0 0.0
    %502 = vmatpush1.msra.mxu0 0.0
    %503 = vmatprep.subr.mxu0 0.0
    %504 = vmatpush1.msra.mxu0 0.0
    %505 = vmatprep.subr.mxu0 0.0
    %506 = vmatpush1.msra.mxu0 0.0
    %507 = vmatprep.subr.mxu0 0.0
    %508 = vmatpush1.msra.mxu0 0.0
    %509 = vmatprep.subr.mxu0 0.0
    %510 = vmatpush1.msra.mxu0 0.0
    %511 = vmatprep.subr.mxu0 0.0
    %512 = vmatpush1.msra.mxu0 0.0
    %513 = vmatprep.subr.mxu0 0.0
    %514 = vmatpush1.msra.mxu0 0.0
    %515 = vmatprep.subr.mxu0 0.0
    %516 = vmatpush1.msra.mxu0 0.0
    %517 = vmatprep.subr.mxu0 0.0
    %518 = vmatpush1.msra.mxu0 0.0
    %519 = vmatprep.subr.mxu0 0.0
    %520 = vmatpush1.msra.mxu0 0.0
    %521 = vmatprep.subr.mxu0 0.0
    %522 = vmatpush1.msra.mxu0 0.0
    %523 = vmatprep.subr.mxu0 0.0
    %524 = vmatpush1.msra.mxu0 0.0
    %525 = vmatprep.subr.mxu0 0.0
    %526 = vmatpush1.msra.mxu0 0.0
    %527 = vmatprep.subr.mxu0 0.0
    %528 = vmatpush1.msra.mxu0 0.0
    %529 = vmatprep.subr.mxu0 0.0
    %530 = vmatpush1.msra.mxu0 0.0
    %531 = vmatprep.subr.mxu0 0.0
    %532 = vmatpush1.msra.mxu0 0.0
    %533 = vmatprep.subr.mxu0 0.0
    %534 = vmatpush1.msra.mxu0 0.0
    %535 = vmatprep.subr.mxu0 0.0
    %536 = vmatpush1.msra.mxu0 0.0
    %537 = vmatprep.subr.mxu0 0.0
    %538 = vmatpush1.msra.mxu0 0.0
    %539 = vmatprep.subr.mxu0 0.0
    %540 = vmatpush1.msra.mxu0 0.0
    %541 = vmatprep.subr.mxu0 0.0
    %542 = vmatpush1.msra.mxu0 0.0
    %543 = vmatprep.mubr.f32.mxu0 0.0
    %544 = vmatmul.mubr.f32.gmra.mrb[0].mxu0 %v477
    %v545 = vpop.f32.mrb[0].mxu0
    %v546 = vadd.f32 0.0, %v545
    %v547 = vpop.f32.mrb[0].mxu0
    %548 = vdwg.mxu0
    %v550 = vrot.slane %v546, 1
    %v553 = vmul.f32 %v466, %v546
    %v554 = vmul.f32 %v472, %v550
    %v557 = vrot.slane %v554, 7
    %v558 = vsel %vm475, %v557, %v553
    %v560 = vadd.f32 %v254, %v558
    %v561 = vld [vmem:[%s7] sm:$0x1]
    %v562 = vld [vmem:[%s8] sm:$0x1]
    %v563 = vld [vmem:[#allocation5] sm:$0xff]
    %v564 = vld [vmem:[#allocation5 + $0x8] sm:$0xff]
    %v565 = vld [vmem:[#allocation5 + $0x10] sm:$0xff]
    %v566 = vld [vmem:[#allocation5 + $0x18] sm:$0xff]
    %v567 = vld [vmem:[#allocation5 + $0x20] sm:$0xff]
    %v568 = vld [vmem:[#allocation5 + $0x28] sm:$0xff]
    %v569 = vld [vmem:[#allocation5 + $0x30] sm:$0xff]
    %v570 = vld [vmem:[#allocation5 + $0x38] sm:$0xff]
    %v571 = vld [vmem:[#allocation5 + $0x40] sm:$0xff]
    %v572 = vld [vmem:[#allocation5 + $0x48] sm:$0xff]
    %v573 = vld [vmem:[#allocation5 + $0x50] sm:$0xff]
    %v574 = vld [vmem:[#allocation5 + $0x58] sm:$0xff]
    %v575 = vld [vmem:[#allocation5 + $0x60] sm:$0xff]
    %v576 = vld [vmem:[#allocation5 + $0x68] sm:$0xff]
    %v577 = vld [vmem:[#allocation5 + $0x70] sm:$0xff]
    %v578 = vld [vmem:[#allocation5 + $0x78] sm:$0xff]
    %v579 = vld [vmem:[%s10] sm:$0x1]
    %v580 = vld [vmem:[%s11] sm:$0x1]
    %v581 = vld [vmem:[%s12] sm:$0x1]
    %vm582 = vcmask 1041408
    %v583 = vsel %vm582, %v560, 0.0
    %v584 = vrot.slane %v583, 4
    %v585 = vadd.f32 %v583, %v584
    %v586 = vrot.slane %v585, 2
    %v587 = vadd.f32 %v585, %v586
    %v588 = vrot.slane %v587, 1
    %v589 = vadd.f32 %v587, %v588
    %v590 = vrcp.pop 2.0
    %v591 = vmul.f32 %v589, %v590
    %v592 = vsub.f32 %v560, %v591
    %v593 = vmul.f32 %v592, %v592
    %v594 = vsel %vm582, %v593, 0.0
    %v595 = vrot.slane %v594, 4
    %v596 = vadd.f32 %v594, %v595
    %v597 = vrot.slane %v596, 2
    %v598 = vadd.f32 %v596, %v597
    %v599 = vrot.slane %v598, 1
    %v600 = vadd.f32 %v598, %v599
    %v601 = vmul.f32 %v600, %v590
    %v602 = vadd.f32 %v601, 1e-05
    %v603 = vrsqrt.pop %v602
    %v604 = vmul.f32 %v592, %v603
    %v606 = vlaneseq
    %v607 = vshrl.u32 %v606, 7
    %v608 = vsub.s32 0, %v607
    %v609 = vrot.slane %v561, %v608
    %v611 = vmul.f32 %v604, %v609
    %v613 = vlaneseq
    %v614 = vshrl.u32 %v613, 7
    %v615 = vsub.s32 0, %v614
    %v616 = vrot.slane %v562, %v615
    %v618 = vadd.f32 %v611, %v616
    %v620 = vlaneseq
    %v621 = vshrl.u32 %v620, 7
    %v622 = vsub.s32 0, %v621
    %v623 = vrot.slane %v579, %v622
    %625 = vmatprep.subr.mxu0 0.0
    %626 = vmatpush1.msra.mxu0 %v563
    %627 = vmatprep.subr.mxu0 0.0
    %628 = vmatpush1.msra.mxu0 %v564
    %629 = vmatprep.subr.mxu0 0.0
    %630 = vmatpush1.msra.mxu0 %v565
    %631 = vmatprep.subr.mxu0 0.0
    %632 = vmatpush1.msra.mxu0 %v566
    %633 = vmatprep.subr.mxu0 0.0
    %634 = vmatpush1.msra.mxu0 %v567
    %635 = vmatprep.subr.mxu0 0.0
    %636 = vmatpush1.msra.mxu0 %v568
    %637 = vmatprep.subr.mxu0 0.0
    %638 = vmatpush1.msra.mxu0 %v569
    %639 = vmatprep.subr.mxu0 0.0
    %640 = vmatpush1.msra.mxu0 %v570
    %641 = vmatprep.subr.mxu0 0.0
    %642 = vmatpush1.msra.mxu0 %v571
    %643 = vmatprep.subr.mxu0 0.0
    %644 = vmatpush1.msra.mxu0 %v572
    %645 = vmatprep.subr.mxu0 0.0
    %646 = vmatpush1.msra.mxu0 %v573
    %647 = vmatprep.subr.mxu0 0.0
    %648 = vmatpush1.msra.mxu0 %v574
    %649 = vmatprep.subr.mxu0 0.0
    %650 = vmatpush1.msra.mxu0 %v575
    %651 = vmatprep.subr.mxu0 0.0
    %652 = vmatpush1.msra.mxu0 %v576
    %653 = vmatprep.subr.mxu0 0.0
    %654 = vmatpush1.msra.mxu0 %v577
    %655 = vmatprep.subr.mxu0 0.0
    %656 = vmatpush1.msra.mxu0 %v578
    %657 = vmatprep.subr.mxu0 0.0
    %658 = vmatpush1.msra.mxu0 0.0
    %659 = vmatprep.subr.mxu0 0.0
    %660 = vmatpush1.msra.mxu0 0.0
    %661 = vmatprep.subr.mxu0 0.0
    %662 = vmatpush1.msra.mxu0 0.0
    %663 = vmatprep.subr.mxu0 0.0
    %664 = vmatpush1.msra.mxu0 0.0
    %665 = vmatprep.subr.mxu0 0.0
    %666 = vmatpush1.msra.mxu0 0.0
    %667 = vmatprep.subr.mxu0 0.0
    %668 = vmatpush1.msra.mxu0 0.0
    %669 = vmatprep.subr.mxu0 0.0
    %670 = vmatpush1.msra.mxu0 0.0
    %671 = vmatprep.subr.mxu0 0.0
    %672 = vmatpush1.msra.mxu0 0.0
    %673 = vmatprep.subr.mxu0 0.0
    %674 = vmatpush1.msra.mxu0 0.0
    %675 = vmatprep.subr.mxu0 0.0
    %676 = vmatpush1.msra.mxu0 0.0
    %677 = vmatprep.subr.mxu0 0.0
    %678 = vmatpush1.msra.mxu0 0.0
    %679 = vmatprep.subr.mxu0 0.0
    %680 = vmatpush1.msra.mxu0 0.0
    %681 = vmatprep.subr.mxu0 0.0
    %682 = vmatpush1.msra.mxu0 0.0
    %683 = vmatprep.subr.mxu0 0.0
    %684 = vmatpush1.msra.mxu0 0.0
    %685 = vmatprep.subr.mxu0 0.0
    %686 = vmatpush1.msra.mxu0 0.0
    %687 = vmatprep.subr.mxu0 0.0
    %688 = vmatpush1.msra.mxu0 0.0
    %689 = vmatprep.mubr.f32.mxu0 0.0
    %690 = vmatmul.mubr.f32.gmra.mrb[0].mxu0 %v618
    %v691 = vpop.f32.mrb[0].mxu0
    %v692 = vadd.f32 %v623, %v691
    %v693 = vpop.f32.mrb[0].mxu0
    %694 = vdwg.mxu0
    %v695 = vmax.f32 %v692, 0.0
    %v696 = vadd.f32 %v618, %v695
    %v697 = vsel %vm582, %v696, 0.0
    %v698 = vrot.slane %v697, 4
    %v699 = vadd.f32 %v697, %v698
    %v700 = vrot.slane %v699, 2
    %v701 = vadd.f32 %v699, %v700
    %v702 = vrot.slane %v701, 1
    %v703 = vadd.f32 %v701, %v702
    %v704 = vmul.f32 %v703, %v590
    %v705 = vsub.f32 %v696, %v704
    %v706 = vmul.f32 %v705, %v705
    %v707 = vsel %vm582, %v706, 0.0
    %v708 = vrot.slane %v707, 4
    %v709 = vadd.f32 %v707, %v708
    %v710 = vrot.slane %v709, 2
    %v711 = vadd.f32 %v709, %v710
    %v712 = vrot.slane %v711, 1
    %v713 = vadd.f32 %v711, %v712
    %v714 = vmul.f32 %v713, %v590
    %v715 = vadd.f32 %v714, 1e-05
    %v716 = vrsqrt.pop %v715
    %v717 = vmul.f32 %v705, %v716
    %v719 = vlaneseq
    %v720 = vshrl.u32 %v719, 7
    %v721 = vsub.s32 0, %v720
    %v722 = vrot.slane %v580, %v721
    %v724 = vmul.f32 %v717, %v722
    %v726 = vlaneseq
    %v727 = vshrl.u32 %v726, 7
    %v728 = vsub.s32 0, %v727
    %v729 = vrot.slane %v581, %v728
    %v731 = vadd.f32 %v724, %v729
    %732 = vst [vmem:[#allocation7] sm:$0x3] %v731
    // Predicated region
    $region62: #{tpu_custom_call.1} parent=1 // pred_check
      _
    $region63: #{tpu_custom_call.1} parent=1 // pred_check_branch
      %734 = sbr.rel (0) target = $region65
    $region64: #{tpu_custom_call.1} parent=1 // pred_region
      %s736 = ssub.s32 32, 32
      %737 = vsyncadd [#allocation4], %s736
      %s739 = sshll.u32 [#allocation7], 4
      %s740 = int_to_ptr.vmem [resolvable:$true] %s739
      %742 = dma.vmem_to_hbm [thread:$0]  %s740, 32, %s13, [#allocation4]
    $region65: #{tpu_custom_call.1} parent=1 // pred_fallthru
      _
    // Predicated region
    $region66: #{tpu_custom_call.1} parent=1 // pred_check
      _
    $region67: #{tpu_custom_call.1} parent=1 // pred_check_branch
      %744 = sbr.rel (0) target = $region69
    $region68: #{tpu_custom_call.1} parent=1 // pred_region
      %745 = dma.done [#allocation4], 32
    $region69: #{tpu_custom_call.1} parent=1 // pred_fallthru
      _
    %746 = vsyncpa [#allocation3], 1
    %747 = vsyncpa [#allocation6], 1
    %748 = vsyncpa [#allocation4], 1

</llo_original>
